<compile_context>
chip_gen: v6e
topology: v6e:2x2x1
jax: 0.10.0
libtpu: 0.0.40
codegen_flags: <defaults>
</compile_context>

<pallas_src>
import functools

import jax
import jax.numpy as jnp
from jax.experimental import pallas as pl
from jax.experimental.pallas import tpu as pltpu


def _fused_kernel(patches_ref, wconv_ref, bconv_ref, wfc_ref, bfc_ref, out_ref,
                  acc_ref):
    # patches_ref: (tb, hwc, K)          bf16  im2col rows, one HW chunk of tb images
    # wconv_ref:   (K, Cout_pad)         bf16  (resident)
    # bconv_ref:   (1, Cout_pad)         f32
    # wfc_ref:     (Cout_pad, NC_pad)    f32   (pre-scaled by 1/HW -> folds GAP mean)
    # bfc_ref:     (1, NC_pad)           f32
    # out_ref:     (tb, NC_pad)          f32   (resident across the chunk axis)
    # acc_ref:     (tb, Cout_pad)        f32   scratch accumulator
    tb, hwc, K = patches_ref.shape
    c = pl.program_id(1)

    @pl.when(c == 0)
    def _init():
        acc_ref[...] = jnp.zeros_like(acc_ref)

    # Conv for this HW chunk: one lane-dense MXU matmul, f32 accumulation.
    rows = patches_ref[...].reshape(tb * hwc, K)                   # major-dim collapse
    h = jnp.dot(rows, wconv_ref[...],
                preferred_element_type=jnp.float32)                # (tb*hwc, Cout_pad)
    h = jnp.maximum(h + bconv_ref[...], 0.0)                       # bias + ReLU (f32)

    # Partial global-average-pool (sum; 1/HW folded into wfc): single
    # reshape + sublane reduction instead of per-image slices + concat.
    acc_ref[...] += jnp.sum(h.reshape(tb, hwc, h.shape[-1]), axis=1)

    @pl.when(c == pl.num_programs(1) - 1)
    def _finalize():
        logits = jnp.dot(acc_ref[...], wfc_ref[...],
                         preferred_element_type=jnp.float32)       # (tb, NC_pad)
        out_ref[...] = logits + bfc_ref[...]


def _im2col_nhwc(x_nhwc, k=3, pad=1):
    B, H, W, C = x_nhwc.shape
    xp = jnp.pad(x_nhwc, ((0, 0), (pad, pad), (pad, pad), (0, 0)))
    cols = []
    for di in range(k):
        for dj in range(k):
            cols.append(xp[:, di:di + H, dj:dj + W, :])            # (B, H, W, C)
    patches = jnp.concatenate(cols, axis=-1)                       # (B, H, W, k*k*C)
    return patches.reshape(B, H * W, k * k * C)


def _round_up(x, m):
    return ((x + m - 1) // m) * m


def _pick_tiles(B, HW, K, cout_pad):
    """Pick (tb, hwc).

    tb: 8-row batch tile (sublane-dense f32 output rows) when B >= 8, else the
        whole (small) batch; B is later zero-padded to a multiple of tb.
    hwc: HW-chunk size bounding the streamed patches block (bf16, double
        buffered) plus the f32 conv intermediate to a fixed VMEM budget that is
        safe on v5e/v6e/v7x; chosen as HW itself when it fits, else the largest
        8-aligned divisor of HW under the budget (full HW fallback otherwise).
    """
    tb = 8 if B >= 8 else B
    budget = 12 << 20   # streamed bytes per step; well under every gen's VMEM

    def step_bytes(hwc):
        # patches block x2 buffers (bf16) + f32 conv intermediate for the chunk
        return tb * hwc * (2 * K * 2 + cout_pad * 4)

    if step_bytes(HW) <= budget:
        return tb, HW
    hwc = None
    for d in range(8, HW + 1, 8):
        if HW % d == 0 and step_bytes(d) <= budget:
            hwc = d
    if hwc is None:
        hwc = HW          # no clean divisor: accept full HW (correctness first)
    return tb, hwc


@functools.partial(jax.jit, static_argnames=("k", "pad"))
def network_forward(x_nchw, conv_w, conv_b, fc_w, fc_b, *, k=3, pad=1):
    """Forward pass of `network`.

    x_nchw : (B, Cin, H, W)       float32, PyTorch NCHW layout
    conv_w : (Cout, Cin, k, k)    stand-in feature-extractor conv weight
    conv_b : (Cout,)
    fc_w   : (numclass, Cout)     PyTorch Linear weight layout
    fc_b   : (numclass,)
    returns: (B, numclass) float32
    """
    B, Cin, H, W = x_nchw.shape
    Cout = conv_w.shape[0]
    numclass = fc_w.shape[0]
    HW = H * W
    K = k * k * Cin

    LANE = 128
    cout_pad = _round_up(Cout, LANE)        # lane-dense conv output / fc input
    nc_pad = _round_up(numclass, LANE)      # lane-dense (unmasked) output store

    tb, hwc = _pick_tiles(B, HW, K, cout_pad)
    B_pad = _round_up(B, tb)

    # --- glue: layout conversion + im2col (plain JAX) ---
    x_nhwc = jnp.transpose(x_nchw, (0, 2, 3, 1))                   # NCHW -> NHWC
    patches = _im2col_nhwc(x_nhwc, k=k, pad=pad)                   # (B, HW, K) f32
    if B_pad != B:                                                 # zero images
        patches = jnp.pad(patches, ((0, B_pad - B), (0, 0), (0, 0)))
    patches = patches.astype(jnp.bfloat16)                         # (B_pad, HW, K)

    # Conv weight: (Cout, Cin, kh, kw) -> (kh, kw, Cin, Cout) -> (K, Cout_pad)
    # matching the [di, dj, channel] ordering of the im2col patches.
    wconv = jnp.transpose(conv_w, (2, 3, 1, 0)).reshape(K, Cout)
    wconv = jnp.pad(wconv, ((0, 0), (0, cout_pad - Cout))).astype(jnp.bfloat16)
    bconv = jnp.pad(conv_b, (0, cout_pad - Cout)).reshape(1, cout_pad)
    bconv = bconv.astype(jnp.float32)
    # fc: y = feat @ W.T + b; fold the 1/HW global-avg-pool scale into W.T.
    # Kept in f32 (fc FLOPs are negligible; avoids the bf16 round-trip).
    wfc = jnp.transpose(fc_w, (1, 0)) * (1.0 / HW)                 # (Cout, numclass)
    wfc = jnp.pad(wfc, ((0, cout_pad - Cout), (0, nc_pad - numclass)))
    wfc = wfc.astype(jnp.float32)
    bfc = jnp.pad(fc_b, (0, nc_pad - numclass)).reshape(1, nc_pad)
    bfc = bfc.astype(jnp.float32)

    grid = (B_pad // tb, HW // hwc)

    out = pl.pallas_call(
        _fused_kernel,
        out_shape=jax.ShapeDtypeStruct((B_pad, nc_pad), jnp.float32),
        grid=grid,
        in_specs=[
            pl.BlockSpec((tb, hwc, K), lambda b, c: (b, c, 0)),      # streamed patches
            pl.BlockSpec((K, cout_pad), lambda b, c: (0, 0)),        # conv weight (resident)
            pl.BlockSpec((1, cout_pad), lambda b, c: (0, 0)),        # conv bias
            pl.BlockSpec((cout_pad, nc_pad), lambda b, c: (0, 0)),   # fc weight (resident)
            pl.BlockSpec((1, nc_pad), lambda b, c: (0, 0)),          # fc bias
        ],
        out_specs=pl.BlockSpec((tb, nc_pad), lambda b, c: (b, 0)),   # resident over chunks
        scratch_shapes=[pltpu.VMEM((tb, cout_pad), jnp.float32)],    # pooled-sum accumulator
        compiler_params=pltpu.CompilerParams(
            dimension_semantics=("parallel", "arbitrary"),
            vmem_limit_bytes=32 * 1024 * 1024),
    )(patches, wconv, bconv, wfc, bfc)

    return out[:B, :numclass]


def _reference_forward(x_nchw, conv_w, conv_b, fc_w, fc_b, k=3, pad=1):
    # Pure-JAX f32 reference for correctness check.
    y = jax.lax.conv_general_dilated(
        x_nchw, conv_w, window_strides=(1, 1), padding=((pad, pad), (pad, pad)),
        dimension_numbers=("NCHW", "OIHW", "NCHW"))
    y = y + conv_b.reshape(1, -1, 1, 1)
    y = jnp.maximum(y, 0.0)
    feat = jnp.mean(y, axis=(2, 3))                                 # (B, Cout)
    return feat @ fc_w.T + fc_b


if __name__ == "__main__":
    # Small deterministic shapes consistent with the module's forward.
    B, Cin, H, W = 2, 4, 16, 16
    Cout = 32           # feature_extractor.fc.in_features (stand-in)
    numclass = 10
    k, pad = 3, 1

    key = jax.random.PRNGKey(0)
    kx, kcw, kcb, kfw, kfb = jax.random.split(key, 5)
    x = jax.random.normal(kx, (B, Cin, H, W), dtype=jnp.float32)
    conv_w = jax.random.normal(kcw, (Cout, Cin, k, k), dtype=jnp.float32) * 0.1
    conv_b = jax.random.normal(kcb, (Cout,), dtype=jnp.float32) * 0.1
    fc_w = jax.random.normal(kfw, (numclass, Cout), dtype=jnp.float32) * 0.1
    fc_b = jax.random.normal(kfb, (numclass,), dtype=jnp.float32) * 0.1

    out = network_forward(x, conv_w, conv_b, fc_w, fc_b, k=k, pad=pad)
    out = jax.block_until_ready(out)

    ref = _reference_forward(x, conv_w, conv_b, fc_w, fc_b, k=k, pad=pad)
    assert out.shape == (B, numclass)
    # bf16 conv operands with f32 accumulation -> loosened tolerance vs f32 ref.
    assert jnp.allclose(out, ref, atol=2e-2, rtol=2e-2), (out, ref)
    print("KERNEL_OK")
</pallas_src>

<mosaic_0001>
module attributes {stable_mosaic.version = 11 : i64} {
  func.func @_fused_kernel(%arg0: i32, %arg1: i32, %arg2: memref<2x256x36xbf16, #tpu.memory_space<vmem>>, %arg3: memref<36x128xbf16, #tpu.memory_space<vmem>>, %arg4: memref<1x128xf32, #tpu.memory_space<vmem>>, %arg5: memref<128x128xf32, #tpu.memory_space<vmem>>, %arg6: memref<1x128xf32, #tpu.memory_space<vmem>>, %arg7: memref<2x128xf32, #tpu.memory_space<vmem>>, %arg8: memref<2x128xf32, #tpu.memory_space<vmem>>) attributes {dimension_semantics = [#tpu.dimension_semantics<parallel>, #tpu.dimension_semantics<arbitrary>], iteration_bounds = array<i64: 1, 1>, scalar_prefetch = 0 : i64, scratch_operands = 1 : i64, tpu.core_type = #tpu.core_type<tc>, window_params = [{transform_indices = @transform_0, window_bounds = array<i64: 2, 256, 36>}, {pipeline_mode = #tpu.pipeline_mode<synchronous>, transform_indices = @transform_1, window_bounds = array<i64: 36, 128>}, {pipeline_mode = #tpu.pipeline_mode<synchronous>, transform_indices = @transform_2, window_bounds = array<i64: 1, 128>}, {pipeline_mode = #tpu.pipeline_mode<synchronous>, transform_indices = @transform_3, window_bounds = array<i64: 128, 128>}, {pipeline_mode = #tpu.pipeline_mode<synchronous>, transform_indices = @transform_4, window_bounds = array<i64: 1, 128>}, {transform_indices = @transform_5, window_bounds = array<i64: 2, 128>}]} {
    %c0_i32 = arith.constant 0 : i32
    %0 = arith.cmpi eq, %arg1, %c0_i32 : i32
    %1 = arith.extui %0 : i1 to i32
    %c0_i32_0 = arith.constant 0 : i32
    %2 = arith.cmpi ne, %1, %c0_i32_0 : i32
    scf.if %2 {
      %cst_15 = arith.constant 0.000000e+00 : f32
      %20 = vector.broadcast %cst_15 : f32 to vector<2x128xf32>
      %c0_16 = arith.constant 0 : index
      %c0_17 = arith.constant 0 : index
      %21 = vector.load %arg8[%c0_16, %c0_17] : memref<2x128xf32, #tpu.memory_space<vmem>>, vector<2x128xf32>
      tpu.vector_store %arg8[%c0_16, %c0_17], %20 {strides = array<i32>} : memref<2x128xf32, #tpu.memory_space<vmem>>, vector<2x128xf32>,
    } else {
    }
    %c0 = arith.constant 0 : index
    %c0_1 = arith.constant 0 : index
    %c0_2 = arith.constant 0 : index
    %3 = vector.load %arg2[%c0, %c0_1, %c0_2] : memref<2x256x36xbf16, #tpu.memory_space<vmem>>, vector<2x256x36xbf16>
    %4 = vector.shape_cast %3 : vector<2x256x36xbf16> to vector<512x36xbf16>
    %c0_3 = arith.constant 0 : index
    %c0_4 = arith.constant 0 : index
    %5 = vector.load %arg3[%c0_3, %c0_4] : memref<36x128xbf16, #tpu.memory_space<vmem>>, vector<36x128xbf16>
    %cst = arith.constant dense<0.000000e+00> : vector<512x128xf32>
    %6 = tpu.matmul %4, %5, %cst {dimension_numbers = #tpu.dot_dimension_numbers<[1], [0], [0], [1], [0, 0, 1, 1], [], []>} : vector<512x36xbf16>, vector<36x128xbf16>, vector<512x128xf32> -> vector<512x128xf32>
    %c0_5 = arith.constant 0 : index
    %c0_6 = arith.constant 0 : index
    %7 = vector.load %arg4[%c0_5, %c0_6] : memref<1x128xf32, #tpu.memory_space<vmem>>, vector<1x128xf32>
    %8 = vector.broadcast %7 : vector<1x128xf32> to vector<512x128xf32>
    %9 = arith.addf %6, %8 : vector<512x128xf32>
    %cst_7 = arith.constant 0.000000e+00 : f32
    %10 = vector.broadcast %cst_7 : f32 to vector<512x128xf32>
    %11 = arith.maximumf %9, %10 : vector<512x128xf32>
    %c0_8 = arith.constant 0 : index
    %c0_9 = arith.constant 0 : index
    %12 = vector.load %arg8[%c0_8, %c0_9] : memref<2x128xf32, #tpu.memory_space<vmem>>, vector<2x128xf32>
    %13 = vector.shape_cast %11 : vector<512x128xf32> to vector<2x256x128xf32>
    %cst_10 = arith.constant dense<0.000000e+00> : vector<2x128xf32>
    %14 = vector.multi_reduction <add>, %13, %cst_10 [1] : vector<2x256x128xf32> to vector<2x128xf32>
    %15 = arith.addf %12, %14 : vector<2x128xf32>
    %c0_11 = arith.constant 0 : index
    %c0_12 = arith.constant 0 : index
    %16 = vector.load %arg8[%c0_11, %c0_12] : memref<2x128xf32, #tpu.memory_space<vmem>>, vector<2x128xf32>
    tpu.vector_store %arg8[%c0_11, %c0_12], %15 {strides = array<i32>} : memref<2x128xf32, #tpu.memory_space<vmem>>, vector<2x128xf32>,
    %c0_i32_13 = arith.constant 0 : i32
    %17 = arith.cmpi eq, %arg1, %c0_i32_13 : i32
    %18 = arith.extui %17 : i1 to i32
    %c0_i32_14 = arith.constant 0 : i32
    %19 = arith.cmpi ne, %18, %c0_i32_14 : i32
    scf.if %19 {
      %c0_15 = arith.constant 0 : index
      %c0_16 = arith.constant 0 : index
      %20 = vector.load %arg8[%c0_15, %c0_16] : memref<2x128xf32, #tpu.memory_space<vmem>>, vector<2x128xf32>
      %c0_17 = arith.constant 0 : index
      %c0_18 = arith.constant 0 : index
      %21 = vector.load %arg5[%c0_17, %c0_18] : memref<128x128xf32, #tpu.memory_space<vmem>>, vector<128x128xf32>
      %cst_19 = arith.constant dense<0.000000e+00> : vector<2x128xf32>
      %22 = tpu.matmul %20, %21, %cst_19 {dimension_numbers = #tpu.dot_dimension_numbers<[1], [0], [0], [1], [0, 0, 1, 1], [], []>} : vector<2x128xf32>, vector<128x128xf32>, vector<2x128xf32> -> vector<2x128xf32>
      %c0_20 = arith.constant 0 : index
      %c0_21 = arith.constant 0 : index
      %23 = vector.load %arg6[%c0_20, %c0_21] : memref<1x128xf32, #tpu.memory_space<vmem>>, vector<1x128xf32>
      %24 = vector.broadcast %23 : vector<1x128xf32> to vector<2x128xf32>
      %25 = arith.addf %22, %24 : vector<2x128xf32>
      %c0_22 = arith.constant 0 : index
      %c0_23 = arith.constant 0 : index
      %26 = vector.load %arg7[%c0_22, %c0_23] : memref<2x128xf32, #tpu.memory_space<vmem>>, vector<2x128xf32>
      tpu.vector_store %arg7[%c0_22, %c0_23], %25 {strides = array<i32>} : memref<2x128xf32, #tpu.memory_space<vmem>>, vector<2x128xf32>,
    } else {
    }
    return
  }
  func.func @transform_0(%arg0: i32, %arg1: i32) -> (i32, i32, i32) {
    %c0_i32 = arith.constant 0 : i32
    %c0_i32_0 = arith.constant 0 : i32
    return %arg0, %arg1, %c0_i32 : i32, i32, i32
  }
  func.func @transform_1(%arg0: i32, %arg1: i32) -> (i32, i32) {
    %c0_i32 = arith.constant 0 : i32
    %c0_i32_0 = arith.constant 0 : i32
    %c0_i32_1 = arith.constant 0 : i32
    return %c0_i32, %c0_i32_0 : i32, i32
  }
  func.func @transform_2(%arg0: i32, %arg1: i32) -> (i32, i32) {
    %c0_i32 = arith.constant 0 : i32
    %c0_i32_0 = arith.constant 0 : i32
    %c0_i32_1 = arith.constant 0 : i32
    return %c0_i32, %c0_i32_0 : i32, i32
  }
  func.func @transform_3(%arg0: i32, %arg1: i32) -> (i32, i32) {
    %c0_i32 = arith.constant 0 : i32
    %c0_i32_0 = arith.constant 0 : i32
    %c0_i32_1 = arith.constant 0 : i32
    return %c0_i32, %c0_i32_0 : i32, i32
  }
  func.func @transform_4(%arg0: i32, %arg1: i32) -> (i32, i32) {
    %c0_i32 = arith.constant 0 : i32
    %c0_i32_0 = arith.constant 0 : i32
    %c0_i32_1 = arith.constant 0 : i32
    return %c0_i32, %c0_i32_0 : i32, i32
  }
  func.func @transform_5(%arg0: i32, %arg1: i32) -> (i32, i32) {
    %c0_i32 = arith.constant 0 : i32
    %c0_i32_0 = arith.constant 0 : i32
    return %arg0, %c0_i32 : i32, i32
  }
}

</mosaic_0001>

<llo_original>
// kernel: network_forward.1
$region0: #{network_forward.1}
  #allocation0 [shape = 'u32[]', space=smem, size = 0x4, offset = 0x4, fixed_abs, tag = 'smem constant byte address 0x4 - core index']
  #allocation1 [shape = 'u32[144,128]{1,0:T(1,128)}', space=vmem, size = 0x12000, scoped, tag = 'internal scratch']
  #allocation2 [shape = 'f32[2,128]{1,0:T(2,128)}', space=vmem, size = 0x400, scoped, tag = 'scratch operand']
  %s0 = inlined_call_operand.vmem [shape: bf16[2,256,36], index: 0, kind: input, shape index: {}]
  %s1 = inlined_call_operand.vmem [shape: bf16[36,128], index: 1, kind: input, shape index: {}]
  %s2 = inlined_call_operand.vmem [shape: f32[1,128], index: 2, kind: input, shape index: {}]
  %s3 = inlined_call_operand.vmem [shape: f32[128,128], index: 3, kind: input, shape index: {}]
  %s4 = inlined_call_operand.vmem [shape: f32[1,128], index: 4, kind: input, shape index: {}]
  %s5 = inlined_call_operand.hbm [shape: f32[2,128], index: 5, kind: output, shape index: {}]
  %s6 = sld [smem:[#allocation0]]
  $region38: #{network_forward.1} parent=0
    _
  %s8 = ssub.s32 1, %s6
  %s9 = scalar_select 0, %s8, %s6
  $region1: #{network_forward.1} parent=0
    #allocation3 [shape = 'u8[1024]{0}', space=vmem, size = 0x400, scoped, tag = 'output window, operand 0, single buffered']
    #allocation4 [shape = 's32[1]{0}', space=sflag, size = 0x4, scoped, tag = 'scoped memory for network_forward.1']
    %10 = vsyncpa [#allocation4], 0
    // Predicated region
    $region2: #{network_forward.1} parent=1 // pred_check
      _
    $region3: #{network_forward.1} parent=1 // pred_check_branch
      %12 = sbr.rel (0) target = $region5
    $region4: #{network_forward.1} parent=1 // pred_region
      _
    $region5: #{network_forward.1} parent=1 // pred_fallthru
      _
    // Predicated region
    $region6: #{network_forward.1} parent=1 // pred_check
      _
    $region7: #{network_forward.1} parent=1 // pred_check_branch
      %14 = sbr.rel (0) target = $region9
    $region8: #{network_forward.1} parent=1 // pred_region
      _
    $region9: #{network_forward.1} parent=1 // pred_fallthru
      _
    // Predicated region
    $region10: #{network_forward.1} parent=1 // pred_check
      _
    $region11: #{network_forward.1} parent=1 // pred_check_branch
      %16 = sbr.rel (0) target = $region13
    $region12: #{network_forward.1} parent=1 // pred_region
      _
    $region13: #{network_forward.1} parent=1 // pred_fallthru
      _
    // Predicated region
    $region14: #{network_forward.1} parent=1 // pred_check
      _
    $region15: #{network_forward.1} parent=1 // pred_check_branch
      %18 = sbr.rel (0) target = $region17
    $region16: #{network_forward.1} parent=1 // pred_region
      _
    $region17: #{network_forward.1} parent=1 // pred_fallthru
      _
    // Predicated region
    $region18: #{network_forward.1} parent=1 // pred_check
      _
    $region19: #{network_forward.1} parent=1 // pred_check_branch
      %20 = sbr.rel (0) target = $region21
    $region20: #{network_forward.1} parent=1 // pred_region
      _
    $region21: #{network_forward.1} parent=1 // pred_fallthru
      _
    %p22 = scmp.eq.s32.totalorder 0, 0
    // Predicated region
    $region22: #{network_forward.1} parent=1 // pred_check
      %p23 = pneg %p22
    $region23: #{network_forward.1} parent=1 // pred_check_branch
      %25 = sbr.rel (%p23) target = $region25
    $region24: #{network_forward.1} parent=1 // pred_region
      %26 = vst [vmem:[#allocation2] sm:$0x3] 0.0
    $region25: #{network_forward.1} parent=1 // pred_fallthru
      _
    %v27 = vld [vmem:[%s0] sm:$0xf]
    %v28 = vld [vmem:[%s0 + $0x4] sm:$0xf]
    %v29 = vld [vmem:[%s0 + $0x8] sm:$0xf]
    %v30 = vld [vmem:[%s0 + $0xc] sm:$0xf]
    %v31 = vld [vmem:[%s0 + $0x10] sm:$0xf]
    %v32 = vld [vmem:[%s0 + $0x14] sm:$0xf]
    %v33 = vld [vmem:[%s0 + $0x18] sm:$0xf]
    %v34 = vld [vmem:[%s0 + $0x1c] sm:$0xf]
    %v35 = vld [vmem:[%s0 + $0x20] sm:$0xf]
    %v36 = vld [vmem:[%s0 + $0x24] sm:$0xf]
    %v37 = vld [vmem:[%s0 + $0x28] sm:$0xf]
    %v38 = vld [vmem:[%s0 + $0x2c] sm:$0xf]
    %v39 = vld [vmem:[%s0 + $0x30] sm:$0xf]
    %v40 = vld [vmem:[%s0 + $0x34] sm:$0xf]
    %v41 = vld [vmem:[%s0 + $0x38] sm:$0xf]
    %v42 = vld [vmem:[%s0 + $0x3c] sm:$0xf]
    %v43 = vld [vmem:[%s0 + $0x40] sm:$0xf]
    %v44 = vld [vmem:[%s0 + $0x44] sm:$0xf]
    %v45 = vld [vmem:[%s0 + $0x48] sm:$0xf]
    %v46 = vld [vmem:[%s0 + $0x4c] sm:$0xf]
    %v47 = vld [vmem:[%s0 + $0x50] sm:$0xf]
    %v48 = vld [vmem:[%s0 + $0x54] sm:$0xf]
    %v49 = vld [vmem:[%s0 + $0x58] sm:$0xf]
    %v50 = vld [vmem:[%s0 + $0x5c] sm:$0xf]
    %v51 = vld [vmem:[%s0 + $0x60] sm:$0xf]
    %v52 = vld [vmem:[%s0 + $0x64] sm:$0xf]
    %v53 = vld [vmem:[%s0 + $0x68] sm:$0xf]
    %v54 = vld [vmem:[%s0 + $0x6c] sm:$0xf]
    %v55 = vld [vmem:[%s0 + $0x70] sm:$0xf]
    %v56 = vld [vmem:[%s0 + $0x74] sm:$0xf]
    %v57 = vld [vmem:[%s0 + $0x78] sm:$0xf]
    %v58 = vld [vmem:[%s0 + $0x7c] sm:$0xf]
    %v59 = vld [vmem:[%s0 + $0x80] sm:$0xf]
    %v60 = vld [vmem:[%s0 + $0x84] sm:$0xf]
    %v61 = vld [vmem:[%s0 + $0x88] sm:$0xf]
    %v62 = vld [vmem:[%s0 + $0x8c] sm:$0xf]
    %v63 = vld [vmem:[%s0 + $0x90] sm:$0xf]
    %v64 = vld [vmem:[%s0 + $0x94] sm:$0xf]
    %v65 = vld [vmem:[%s0 + $0x98] sm:$0xf]
    %v66 = vld [vmem:[%s0 + $0x9c] sm:$0xf]
    %v67 = vld [vmem:[%s0 + $0xa0] sm:$0xf]
    %v68 = vld [vmem:[%s0 + $0xa4] sm:$0xf]
    %v69 = vld [vmem:[%s0 + $0xa8] sm:$0xf]
    %v70 = vld [vmem:[%s0 + $0xac] sm:$0xf]
    %v71 = vld [vmem:[%s0 + $0xb0] sm:$0xf]
    %v72 = vld [vmem:[%s0 + $0xb4] sm:$0xf]
    %v73 = vld [vmem:[%s0 + $0xb8] sm:$0xf]
    %v74 = vld [vmem:[%s0 + $0xbc] sm:$0xf]
    %v75 = vld [vmem:[%s0 + $0xc0] sm:$0xf]
    %v76 = vld [vmem:[%s0 + $0xc4] sm:$0xf]
    %v77 = vld [vmem:[%s0 + $0xc8] sm:$0xf]
    %v78 = vld [vmem:[%s0 + $0xcc] sm:$0xf]
    %v79 = vld [vmem:[%s0 + $0xd0] sm:$0xf]
    %v80 = vld [vmem:[%s0 + $0xd4] sm:$0xf]
    %v81 = vld [vmem:[%s0 + $0xd8] sm:$0xf]
    %v82 = vld [vmem:[%s0 + $0xdc] sm:$0xf]
    %v83 = vld [vmem:[%s0 + $0xe0] sm:$0xf]
    %v84 = vld [vmem:[%s0 + $0xe4] sm:$0xf]
    %v85 = vld [vmem:[%s0 + $0xe8] sm:$0xf]
    %v86 = vld [vmem:[%s0 + $0xec] sm:$0xf]
    %v87 = vld [vmem:[%s0 + $0xf0] sm:$0xf]
    %v88 = vld [vmem:[%s0 + $0xf4] sm:$0xf]
    %v89 = vld [vmem:[%s0 + $0xf8] sm:$0xf]
    %v90 = vld [vmem:[%s0 + $0xfc] sm:$0xf]
    %v91 = vld [vmem:[%s1] sm:$0xf]
    %v92 = vld [vmem:[%s1 + $0x4] sm:$0xf]
    %v93 = vld [vmem:[%s1 + $0x8] sm:$0xf]
    %v94 = vld [vmem:[%s1 + $0xc] sm:$0xf]
    %v95 = vld [vmem:[%s1 + $0x10] sm:$0x3]
    %v96 = vld [vmem:[%s2] sm:$0x1]
    %v98 = vlaneseq
    %v99 = vshrl.u32 %v98, 7
    %v100 = vsub.s32 0, %v99
    %v101 = vrot.slane %v96, %v100
    %v167 = vunpack.c.l.b16 %v27
    %v168 = vunpack.c.l.b16 %v28
    %v169 = vunpack.c.l.b16 %v29
    %v170 = vunpack.c.l.b16 %v30
    %v171 = vunpack.c.l.b16 %v31
    %v172 = vunpack.c.l.b16 %v32
    %v173 = vunpack.c.l.b16 %v33
    %v174 = vunpack.c.l.b16 %v34
    %v175 = vunpack.c.l.b16 %v35
    %v176 = vunpack.c.l.b16 %v36
    %v177 = vunpack.c.l.b16 %v37
    %v178 = vunpack.c.l.b16 %v38
    %v179 = vunpack.c.l.b16 %v39
    %v180 = vunpack.c.l.b16 %v40
    %v181 = vunpack.c.l.b16 %v41
    %v182 = vunpack.c.l.b16 %v42
    %v183 = vunpack.c.l.b16 %v43
    %v184 = vunpack.c.l.b16 %v44
    %v185 = vunpack.c.l.b16 %v45
    %v186 = vunpack.c.l.b16 %v46
    %v187 = vunpack.c.l.b16 %v47
    %v188 = vunpack.c.l.b16 %v48
    %v189 = vunpack.c.l.b16 %v49
    %v190 = vunpack.c.l.b16 %v50
    %v191 = vunpack.c.l.b16 %v51
    %v192 = vunpack.c.l.b16 %v52
    %v193 = vunpack.c.l.b16 %v53
    %v194 = vunpack.c.l.b16 %v54
    %v195 = vunpack.c.l.b16 %v55
    %v196 = vunpack.c.l.b16 %v56
    %v197 = vunpack.c.l.b16 %v57
    %v198 = vunpack.c.l.b16 %v58
    %v199 = vunpack.c.l.b16 %v59
    %v200 = vunpack.c.l.b16 %v60
    %v201 = vunpack.c.l.b16 %v61
    %v202 = vunpack.c.l.b16 %v62
    %v203 = vunpack.c.l.b16 %v63
    %v204 = vunpack.c.l.b16 %v64
    %v205 = vunpack.c.l.b16 %v65
    %v206 = vunpack.c.l.b16 %v66
    %v207 = vunpack.c.l.b16 %v67
    %v208 = vunpack.c.l.b16 %v68
    %v209 = vunpack.c.l.b16 %v69
    %v210 = vunpack.c.l.b16 %v70
    %v211 = vunpack.c.l.b16 %v71
    %v212 = vunpack.c.l.b16 %v72
    %v213 = vunpack.c.l.b16 %v73
    %v214 = vunpack.c.l.b16 %v74
    %v215 = vunpack.c.l.b16 %v75
    %v216 = vunpack.c.l.b16 %v76
    %v217 = vunpack.c.l.b16 %v77
    %v218 = vunpack.c.l.b16 %v78
    %v219 = vunpack.c.l.b16 %v79
    %v220 = vunpack.c.l.b16 %v80
    %v221 = vunpack.c.l.b16 %v81
    %v222 = vunpack.c.l.b16 %v82
    %v223 = vunpack.c.l.b16 %v83
    %v224 = vunpack.c.l.b16 %v84
    %v225 = vunpack.c.l.b16 %v85
    %v226 = vunpack.c.l.b16 %v86
    %v227 = vunpack.c.l.b16 %v87
    %v228 = vunpack.c.l.b16 %v88
    %v229 = vunpack.c.l.b16 %v89
    %v230 = vunpack.c.l.b16 %v90
    %v231 = vpack.c.b16 %v168, %v167
    %v232 = vpack.c.b16 %v170, %v169
    %v233 = vpack.c.b16 %v172, %v171
    %v234 = vpack.c.b16 %v174, %v173
    %v235 = vpack.c.b16 %v176, %v175
    %v236 = vpack.c.b16 %v178, %v177
    %v237 = vpack.c.b16 %v180, %v179
    %v238 = vpack.c.b16 %v182, %v181
    %v239 = vpack.c.b16 %v184, %v183
    %v240 = vpack.c.b16 %v186, %v185
    %v241 = vpack.c.b16 %v188, %v187
    %v242 = vpack.c.b16 %v190, %v189
    %v243 = vpack.c.b16 %v192, %v191
    %v244 = vpack.c.b16 %v194, %v193
    %v245 = vpack.c.b16 %v196, %v195
    %v246 = vpack.c.b16 %v198, %v197
    %v247 = vpack.c.b16 %v200, %v199
    %v248 = vpack.c.b16 %v202, %v201
    %v249 = vpack.c.b16 %v204, %v203
    %v250 = vpack.c.b16 %v206, %v205
    %v251 = vpack.c.b16 %v208, %v207
    %v252 = vpack.c.b16 %v210, %v209
    %v253 = vpack.c.b16 %v212, %v211
    %v254 = vpack.c.b16 %v214, %v213
    %v255 = vpack.c.b16 %v216, %v215
    %v256 = vpack.c.b16 %v218, %v217
    %v257 = vpack.c.b16 %v220, %v219
    %v258 = vpack.c.b16 %v222, %v221
    %v259 = vpack.c.b16 %v224, %v223
    %v260 = vpack.c.b16 %v226, %v225
    %v261 = vpack.c.b16 %v228, %v227
    %v262 = vpack.c.b16 %v230, %v229
    %v268 = vunpack.c.l.b16 %v91
    %v269 = vunpack.c.l.b16 %v92
    %v270 = vunpack.c.l.b16 %v93
    %v271 = vunpack.c.l.b16 %v94
    %v272 = vunpack.c.l.b16 %v95
    %v273 = vpack.c.b16 %v269, %v268
    %v274 = vpack.c.b16 %v271, %v270
    %v275 = vpack.c.b16 %v272, %v272
    %vm278 = vcmask 293888
    %v280 = vsel %vm278, %v231, 0
    %v283 = vsel %vm278, %v232, 0
    %v286 = vsel %vm278, %v233, 0
    %v289 = vsel %vm278, %v234, 0
    %v292 = vsel %vm278, %v235, 0
    %v295 = vsel %vm278, %v236, 0
    %v298 = vsel %vm278, %v237, 0
    %v301 = vsel %vm278, %v238, 0
    %v304 = vsel %vm278, %v239, 0
    %v307 = vsel %vm278, %v240, 0
    %v310 = vsel %vm278, %v241, 0
    %v313 = vsel %vm278, %v242, 0
    %v316 = vsel %vm278, %v243, 0
    %v319 = vsel %vm278, %v244, 0
    %v322 = vsel %vm278, %v245, 0
    %v325 = vsel %vm278, %v246, 0
    %v328 = vsel %vm278, %v247, 0
    %v331 = vsel %vm278, %v248, 0
    %v334 = vsel %vm278, %v249, 0
    %v337 = vsel %vm278, %v250, 0
    %v340 = vsel %vm278, %v251, 0
    %v343 = vsel %vm278, %v252, 0
    %v346 = vsel %vm278, %v253, 0
    %v349 = vsel %vm278, %v254, 0
    %v352 = vsel %vm278, %v255, 0
    %v355 = vsel %vm278, %v256, 0
    %v358 = vsel %vm278, %v257, 0
    %v361 = vsel %vm278, %v258, 0
    %v364 = vsel %vm278, %v259, 0
    %v367 = vsel %vm278, %v260, 0
    %v370 = vsel %vm278, %v261, 0
    %v373 = vsel %vm278, %v262, 0
    %vm375 = vcmask 1041408
    %v377 = vsel %vm375, %v275, 0
    %379 = vmatprep.subr.bf16.mxu0 0
    %380 = vmatpush1.bf16.msra.mxu0 0
    %381 = vmatprep.subr.bf16.mxu0 0
    %382 = vmatpush1.bf16.msra.mxu0 0
    %383 = vmatprep.subr.bf16.mxu0 0
    %384 = vmatpush1.bf16.msra.mxu0 0
    %385 = vmatprep.subr.bf16.mxu0 0
    %386 = vmatpush1.bf16.msra.mxu0 0
    %387 = vmatprep.subr.bf16.mxu0 0
    %388 = vmatpush1.bf16.msra.mxu0 0
    %389 = vmatprep.subr.bf16.mxu0 0
    %390 = vmatpush1.bf16.msra.mxu0 %v377
    %391 = vmatprep.subr.bf16.mxu0 0
    %392 = vmatpush1.bf16.msra.mxu0 %v274
    %393 = vmatprep.subr.bf16.mxu0 0
    %394 = vmatpush1.bf16.msra.mxu0 %v273
    %395 = vmatprep.subr.bf16.mxu0 0
    %396 = vmatpush2.bf16.msra.mxu0 0
    %397 = vmatprep.subr.bf16.mxu0 0
    %398 = vmatpush2.bf16.msra.mxu0 0
    %399 = vmatprep.subr.bf16.mxu0 0
    %400 = vmatpush2.bf16.msra.mxu0 0
    %401 = vmatprep.subr.bf16.mxu0 0
    %402 = vmatpush2.bf16.msra.mxu0 0
    %403 = vmatprep.subr.bf16.mxu0 0
    %404 = vmatpush2.bf16.msra.mxu0 0
    %405 = vmatprep.subr.bf16.mxu0 0
    %406 = vmatpush2.bf16.msra.mxu0 0
    %407 = vmatprep.subr.bf16.mxu0 0
    %408 = vmatpush2.bf16.msra.mxu0 0
    %409 = vmatprep.subr.bf16.mxu0 0
    %410 = vmatpush2.bf16.msra.mxu0 0
    %411 = vmatprep.mubr.bf16.mxu0 0
    %412 = vmatmul.mubr.bf16.gmra.mxu0 %v280
    %v413 = vpop.f32.mrf.mxu0
    %v414 = vadd.f32 %v101, %v413
    %v415 = vpop.f32.mrf.mxu0
    %v416 = vpop.f32.mrf.mxu0
    %v417 = vadd.f32 %v101, %v416
    %v418 = vpop.f32.mrf.mxu0
    %419 = vmatprep.mubr.bf16.mxu0 0
    %420 = vmatmul.mubr.bf16.gmra.mxu0 %v283
    %v421 = vpop.f32.mrf.mxu0
    %v422 = vadd.f32 %v101, %v421
    %v423 = vpop.f32.mrf.mxu0
    %v424 = vpop.f32.mrf.mxu0
    %v425 = vadd.f32 %v101, %v424
    %v426 = vpop.f32.mrf.mxu0
    %427 = vmatprep.mubr.bf16.mxu0 0
    %428 = vmatmul.mubr.bf16.gmra.mxu0 %v286
    %v429 = vpop.f32.mrf.mxu0
    %v430 = vadd.f32 %v101, %v429
    %v431 = vpop.f32.mrf.mxu0
    %v432 = vpop.f32.mrf.mxu0
    %v433 = vadd.f32 %v101, %v432
    %v434 = vpop.f32.mrf.mxu0
    %435 = vmatprep.mubr.bf16.mxu0 0
    %436 = vmatmul.mubr.bf16.gmra.mxu0 %v289
    %v437 = vpop.f32.mrf.mxu0
    %v438 = vadd.f32 %v101, %v437
    %v439 = vpop.f32.mrf.mxu0
    %v440 = vpop.f32.mrf.mxu0
    %v441 = vadd.f32 %v101, %v440
    %v442 = vpop.f32.mrf.mxu0
    %443 = vmatprep.mubr.bf16.mxu0 0
    %444 = vmatmul.mubr.bf16.gmra.mxu0 %v292
    %v445 = vpop.f32.mrf.mxu0
    %v446 = vadd.f32 %v101, %v445
    %v447 = vpop.f32.mrf.mxu0
    %v448 = vpop.f32.mrf.mxu0
    %v449 = vadd.f32 %v101, %v448
    %v450 = vpop.f32.mrf.mxu0
    %451 = vmatprep.mubr.bf16.mxu0 0
    %452 = vmatmul.mubr.bf16.gmra.mxu0 %v295
    %v453 = vpop.f32.mrf.mxu0
    %v454 = vadd.f32 %v101, %v453
    %v455 = vpop.f32.mrf.mxu0
    %v456 = vpop.f32.mrf.mxu0
    %v457 = vadd.f32 %v101, %v456
    %v458 = vpop.f32.mrf.mxu0
    %459 = vmatprep.mubr.bf16.mxu0 0
    %460 = vmatmul.mubr.bf16.gmra.mxu0 %v298
    %v461 = vpop.f32.mrf.mxu0
    %v462 = vadd.f32 %v101, %v461
    %v463 = vpop.f32.mrf.mxu0
    %v464 = vpop.f32.mrf.mxu0
    %v465 = vadd.f32 %v101, %v464
    %v466 = vpop.f32.mrf.mxu0
    %467 = vmatprep.mubr.bf16.mxu0 0
    %468 = vmatmul.mubr.bf16.gmra.mxu0 %v301
    %v469 = vpop.f32.mrf.mxu0
    %v470 = vadd.f32 %v101, %v469
    %v471 = vpop.f32.mrf.mxu0
    %v472 = vpop.f32.mrf.mxu0
    %v473 = vadd.f32 %v101, %v472
    %v474 = vpop.f32.mrf.mxu0
    %475 = vmatprep.mubr.bf16.mxu0 0
    %476 = vmatmul.mubr.bf16.gmra.mxu0 %v304
    %v477 = vpop.f32.mrf.mxu0
    %v478 = vadd.f32 %v101, %v477
    %v479 = vpop.f32.mrf.mxu0
    %v480 = vpop.f32.mrf.mxu0
    %v481 = vadd.f32 %v101, %v480
    %v482 = vpop.f32.mrf.mxu0
    %483 = vmatprep.mubr.bf16.mxu0 0
    %484 = vmatmul.mubr.bf16.gmra.mxu0 %v307
    %v485 = vpop.f32.mrf.mxu0
    %v486 = vadd.f32 %v101, %v485
    %v487 = vpop.f32.mrf.mxu0
    %v488 = vpop.f32.mrf.mxu0
    %v489 = vadd.f32 %v101, %v488
    %v490 = vpop.f32.mrf.mxu0
    %491 = vmatprep.mubr.bf16.mxu0 0
    %492 = vmatmul.mubr.bf16.gmra.mxu0 %v310
    %v493 = vpop.f32.mrf.mxu0
    %v494 = vadd.f32 %v101, %v493
    %v495 = vpop.f32.mrf.mxu0
    %v496 = vpop.f32.mrf.mxu0
    %v497 = vadd.f32 %v101, %v496
    %v498 = vpop.f32.mrf.mxu0
    %499 = vmatprep.mubr.bf16.mxu0 0
    %500 = vmatmul.mubr.bf16.gmra.mxu0 %v313
    %v501 = vpop.f32.mrf.mxu0
    %v502 = vadd.f32 %v101, %v501
    %v503 = vpop.f32.mrf.mxu0
    %v504 = vpop.f32.mrf.mxu0
    %v505 = vadd.f32 %v101, %v504
    %v506 = vpop.f32.mrf.mxu0
    %507 = vmatprep.mubr.bf16.mxu0 0
    %508 = vmatmul.mubr.bf16.gmra.mxu0 %v316
    %v509 = vpop.f32.mrf.mxu0
    %v510 = vadd.f32 %v101, %v509
    %v511 = vpop.f32.mrf.mxu0
    %v512 = vpop.f32.mrf.mxu0
    %v513 = vadd.f32 %v101, %v512
    %v514 = vpop.f32.mrf.mxu0
    %515 = vmatprep.mubr.bf16.mxu0 0
    %516 = vmatmul.mubr.bf16.gmra.mxu0 %v319
    %v517 = vpop.f32.mrf.mxu0
    %v518 = vadd.f32 %v101, %v517
    %v519 = vpop.f32.mrf.mxu0
    %v520 = vpop.f32.mrf.mxu0
    %v521 = vadd.f32 %v101, %v520
    %v522 = vpop.f32.mrf.mxu0
    %523 = vmatprep.mubr.bf16.mxu0 0
    %524 = vmatmul.mubr.bf16.gmra.mxu0 %v322
    %v525 = vpop.f32.mrf.mxu0
    %v526 = vadd.f32 %v101, %v525
    %v527 = vpop.f32.mrf.mxu0
    %v528 = vpop.f32.mrf.mxu0
    %v529 = vadd.f32 %v101, %v528
    %v530 = vpop.f32.mrf.mxu0
    %531 = vmatprep.mubr.bf16.mxu0 0
    %532 = vmatmul.mubr.bf16.gmra.mxu0 %v325
    %v533 = vpop.f32.mrf.mxu0
    %v534 = vadd.f32 %v101, %v533
    %v535 = vpop.f32.mrf.mxu0
    %v536 = vpop.f32.mrf.mxu0
    %v537 = vadd.f32 %v101, %v536
    %v538 = vpop.f32.mrf.mxu0
    %539 = vmatprep.mubr.bf16.mxu0 0
    %540 = vmatmul.mubr.bf16.gmra.mxu0 %v328
    %v541 = vpop.f32.mrf.mxu0
    %v542 = vadd.f32 %v101, %v541
    %v543 = vpop.f32.mrf.mxu0
    %v544 = vpop.f32.mrf.mxu0
    %v545 = vadd.f32 %v101, %v544
    %v546 = vpop.f32.mrf.mxu0
    %547 = vmatprep.mubr.bf16.mxu0 0
    %548 = vmatmul.mubr.bf16.gmra.mxu0 %v331
    %v549 = vpop.f32.mrf.mxu0
    %v550 = vadd.f32 %v101, %v549
    %v551 = vpop.f32.mrf.mxu0
    %v552 = vpop.f32.mrf.mxu0
    %v553 = vadd.f32 %v101, %v552
    %v554 = vpop.f32.mrf.mxu0
    %555 = vmatprep.mubr.bf16.mxu0 0
    %556 = vmatmul.mubr.bf16.gmra.mxu0 %v334
    %v557 = vpop.f32.mrf.mxu0
    %v558 = vadd.f32 %v101, %v557
    %v559 = vpop.f32.mrf.mxu0
    %v560 = vpop.f32.mrf.mxu0
    %v561 = vadd.f32 %v101, %v560
    %v562 = vpop.f32.mrf.mxu0
    %563 = vmatprep.mubr.bf16.mxu0 0
    %564 = vmatmul.mubr.bf16.gmra.mxu0 %v337
    %v565 = vpop.f32.mrf.mxu0
    %v566 = vadd.f32 %v101, %v565
    %v567 = vpop.f32.mrf.mxu0
    %v568 = vpop.f32.mrf.mxu0
    %v569 = vadd.f32 %v101, %v568
    %v570 = vpop.f32.mrf.mxu0
    %571 = vmatprep.mubr.bf16.mxu0 0
    %572 = vmatmul.mubr.bf16.gmra.mxu0 %v340
    %v573 = vpop.f32.mrf.mxu0
    %v574 = vadd.f32 %v101, %v573
    %v575 = vpop.f32.mrf.mxu0
    %v576 = vpop.f32.mrf.mxu0
    %v577 = vadd.f32 %v101, %v576
    %v578 = vpop.f32.mrf.mxu0
    %579 = vmatprep.mubr.bf16.mxu0 0
    %580 = vmatmul.mubr.bf16.gmra.mxu0 %v343
    %v581 = vpop.f32.mrf.mxu0
    %v582 = vadd.f32 %v101, %v581
    %v583 = vpop.f32.mrf.mxu0
    %v584 = vpop.f32.mrf.mxu0
    %v585 = vadd.f32 %v101, %v584
    %v586 = vpop.f32.mrf.mxu0
    %587 = vmatprep.mubr.bf16.mxu0 0
    %588 = vmatmul.mubr.bf16.gmra.mxu0 %v346
    %v589 = vpop.f32.mrf.mxu0
    %v590 = vadd.f32 %v101, %v589
    %v591 = vpop.f32.mrf.mxu0
    %v592 = vpop.f32.mrf.mxu0
    %v593 = vadd.f32 %v101, %v592
    %v594 = vpop.f32.mrf.mxu0
    %595 = vmatprep.mubr.bf16.mxu0 0
    %596 = vmatmul.mubr.bf16.gmra.mxu0 %v349
    %v597 = vpop.f32.mrf.mxu0
    %v598 = vadd.f32 %v101, %v597
    %v599 = vpop.f32.mrf.mxu0
    %v600 = vpop.f32.mrf.mxu0
    %v601 = vadd.f32 %v101, %v600
    %v602 = vpop.f32.mrf.mxu0
    %603 = vmatprep.mubr.bf16.mxu0 0
    %604 = vmatmul.mubr.bf16.gmra.mxu0 %v352
    %v605 = vpop.f32.mrf.mxu0
    %v606 = vadd.f32 %v101, %v605
    %v607 = vpop.f32.mrf.mxu0
    %v608 = vpop.f32.mrf.mxu0
    %v609 = vadd.f32 %v101, %v608
    %v610 = vpop.f32.mrf.mxu0
    %611 = vmatprep.mubr.bf16.mxu0 0
    %612 = vmatmul.mubr.bf16.gmra.mxu0 %v355
    %v613 = vpop.f32.mrf.mxu0
    %v614 = vadd.f32 %v101, %v613
    %v615 = vpop.f32.mrf.mxu0
    %v616 = vpop.f32.mrf.mxu0
    %v617 = vadd.f32 %v101, %v616
    %v618 = vpop.f32.mrf.mxu0
    %619 = vmatprep.mubr.bf16.mxu0 0
    %620 = vmatmul.mubr.bf16.gmra.mxu0 %v358
    %v621 = vpop.f32.mrf.mxu0
    %v622 = vadd.f32 %v101, %v621
    %v623 = vpop.f32.mrf.mxu0
    %v624 = vpop.f32.mrf.mxu0
    %v625 = vadd.f32 %v101, %v624
    %v626 = vpop.f32.mrf.mxu0
    %627 = vmatprep.mubr.bf16.mxu0 0
    %628 = vmatmul.mubr.bf16.gmra.mxu0 %v361
    %v629 = vpop.f32.mrf.mxu0
    %v630 = vadd.f32 %v101, %v629
    %v631 = vpop.f32.mrf.mxu0
    %v632 = vpop.f32.mrf.mxu0
    %v633 = vadd.f32 %v101, %v632
    %v634 = vpop.f32.mrf.mxu0
    %635 = vmatprep.mubr.bf16.mxu0 0
    %636 = vmatmul.mubr.bf16.gmra.mxu0 %v364
    %v637 = vpop.f32.mrf.mxu0
    %v638 = vadd.f32 %v101, %v637
    %v639 = vpop.f32.mrf.mxu0
    %v640 = vpop.f32.mrf.mxu0
    %v641 = vadd.f32 %v101, %v640
    %v642 = vpop.f32.mrf.mxu0
    %643 = vmatprep.mubr.bf16.mxu0 0
    %644 = vmatmul.mubr.bf16.gmra.mxu0 %v367
    %v645 = vpop.f32.mrf.mxu0
    %v646 = vadd.f32 %v101, %v645
    %v647 = vpop.f32.mrf.mxu0
    %v648 = vpop.f32.mrf.mxu0
    %v649 = vadd.f32 %v101, %v648
    %v650 = vpop.f32.mrf.mxu0
    %651 = vmatprep.mubr.bf16.mxu0 0
    %652 = vmatmul.mubr.bf16.gmra.mxu0 %v370
    %v653 = vpop.f32.mrf.mxu0
    %v654 = vadd.f32 %v101, %v653
    %v655 = vpop.f32.mrf.mxu0
    %v656 = vpop.f32.mrf.mxu0
    %v657 = vadd.f32 %v101, %v656
    %v658 = vpop.f32.mrf.mxu0
    %659 = vmatprep.mubr.bf16.mxu0 0
    %660 = vmatmul.mubr.bf16.gmra.mxu0 %v373
    %v661 = vpop.f32.mrf.mxu0
    %v662 = vadd.f32 %v101, %v661
    %v663 = vpop.f32.mrf.mxu0
    %v664 = vpop.f32.mrf.mxu0
    %v665 = vadd.f32 %v101, %v664
    %v666 = vpop.f32.mrf.mxu0
    %667 = vdwg.mxu0
    %v668 = vmax.f32 %v414, 0.0
    %v669 = vmax.f32 %v417, 0.0
    %v670 = vmax.f32 %v422, 0.0
    %v671 = vmax.f32 %v425, 0.0
    %v672 = vmax.f32 %v430, 0.0
    %v673 = vmax.f32 %v433, 0.0
    %v674 = vmax.f32 %v438, 0.0
    %v675 = vmax.f32 %v441, 0.0
    %v676 = vmax.f32 %v446, 0.0
    %v677 = vmax.f32 %v449, 0.0
    %v678 = vmax.f32 %v454, 0.0
    %v679 = vmax.f32 %v457, 0.0
    %v680 = vmax.f32 %v462, 0.0
    %v681 = vmax.f32 %v465, 0.0
    %v682 = vmax.f32 %v470, 0.0
    %v683 = vmax.f32 %v473, 0.0
    %v684 = vmax.f32 %v478, 0.0
    %v685 = vmax.f32 %v481, 0.0
    %v686 = vmax.f32 %v486, 0.0
    %v687 = vmax.f32 %v489, 0.0
    %v688 = vmax.f32 %v494, 0.0
    %v689 = vmax.f32 %v497, 0.0
    %v690 = vmax.f32 %v502, 0.0
    %v691 = vmax.f32 %v505, 0.0
    %v692 = vmax.f32 %v510, 0.0
    %v693 = vmax.f32 %v513, 0.0
    %v694 = vmax.f32 %v518, 0.0
    %v695 = vmax.f32 %v521, 0.0
    %v696 = vmax.f32 %v526, 0.0
    %v697 = vmax.f32 %v529, 0.0
    %v698 = vmax.f32 %v534, 0.0
    %v699 = vmax.f32 %v537, 0.0
    %v700 = vmax.f32 %v542, 0.0
    %v701 = vmax.f32 %v545, 0.0
    %v702 = vmax.f32 %v550, 0.0
    %v703 = vmax.f32 %v553, 0.0
    %v704 = vmax.f32 %v558, 0.0
    %v705 = vmax.f32 %v561, 0.0
    %v706 = vmax.f32 %v566, 0.0
    %v707 = vmax.f32 %v569, 0.0
    %v708 = vmax.f32 %v574, 0.0
    %v709 = vmax.f32 %v577, 0.0
    %v710 = vmax.f32 %v582, 0.0
    %v711 = vmax.f32 %v585, 0.0
    %v712 = vmax.f32 %v590, 0.0
    %v713 = vmax.f32 %v593, 0.0
    %v714 = vmax.f32 %v598, 0.0
    %v715 = vmax.f32 %v601, 0.0
    %v716 = vmax.f32 %v606, 0.0
    %v717 = vmax.f32 %v609, 0.0
    %v718 = vmax.f32 %v614, 0.0
    %v719 = vmax.f32 %v617, 0.0
    %v720 = vmax.f32 %v622, 0.0
    %v721 = vmax.f32 %v625, 0.0
    %v722 = vmax.f32 %v630, 0.0
    %v723 = vmax.f32 %v633, 0.0
    %v724 = vmax.f32 %v638, 0.0
    %v725 = vmax.f32 %v641, 0.0
    %v726 = vmax.f32 %v646, 0.0
    %v727 = vmax.f32 %v649, 0.0
    %v728 = vmax.f32 %v654, 0.0
    %v729 = vmax.f32 %v657, 0.0
    %v730 = vmax.f32 %v662, 0.0
    %v731 = vmax.f32 %v665, 0.0
    %v732 = vld [vmem:[#allocation2] sm:$0x3]
    %v733 = vadd.f32 %v668, %v669
    %v734 = vadd.f32 %v733, %v670
    %v735 = vadd.f32 %v734, %v671
    %v736 = vadd.f32 %v735, %v672
    %v737 = vadd.f32 %v736, %v673
    %v738 = vadd.f32 %v737, %v674
    %v739 = vadd.f32 %v738, %v675
    %v740 = vadd.f32 %v739, %v676
    %v741 = vadd.f32 %v740, %v677
    %v742 = vadd.f32 %v741, %v678
    %v743 = vadd.f32 %v742, %v679
    %v744 = vadd.f32 %v743, %v680
    %v745 = vadd.f32 %v744, %v681
    %v746 = vadd.f32 %v745, %v682
    %v747 = vadd.f32 %v746, %v683
    %v748 = vadd.f32 %v747, %v684
    %v749 = vadd.f32 %v748, %v685
    %v750 = vadd.f32 %v749, %v686
    %v751 = vadd.f32 %v750, %v687
    %v752 = vadd.f32 %v751, %v688
    %v753 = vadd.f32 %v752, %v689
    %v754 = vadd.f32 %v753, %v690
    %v755 = vadd.f32 %v754, %v691
    %v756 = vadd.f32 %v755, %v692
    %v757 = vadd.f32 %v756, %v693
    %v758 = vadd.f32 %v757, %v694
    %v759 = vadd.f32 %v758, %v695
    %v760 = vadd.f32 %v759, %v696
    %v761 = vadd.f32 %v760, %v697
    %v762 = vadd.f32 %v761, %v698
    %v763 = vadd.f32 %v762, %v699
    %v764 = vrot.slane %v763, 4
    %v765 = vadd.f32 %v763, %v764
    %v766 = vrot.slane %v765, 2
    %v767 = vadd.f32 %v765, %v766
    %v768 = vrot.slane %v767, 1
    %v769 = vadd.f32 %v767, %v768
    %v770 = vadd.f32 %v700, %v701
    %v771 = vadd.f32 %v770, %v702
    %v772 = vadd.f32 %v771, %v703
    %v773 = vadd.f32 %v772, %v704
    %v774 = vadd.f32 %v773, %v705
    %v775 = vadd.f32 %v774, %v706
    %v776 = vadd.f32 %v775, %v707
    %v777 = vadd.f32 %v776, %v708
    %v778 = vadd.f32 %v777, %v709
    %v779 = vadd.f32 %v778, %v710
    %v780 = vadd.f32 %v779, %v711
    %v781 = vadd.f32 %v780, %v712
    %v782 = vadd.f32 %v781, %v713
    %v783 = vadd.f32 %v782, %v714
    %v784 = vadd.f32 %v783, %v715
    %v785 = vadd.f32 %v784, %v716
    %v786 = vadd.f32 %v785, %v717
    %v787 = vadd.f32 %v786, %v718
    %v788 = vadd.f32 %v787, %v719
    %v789 = vadd.f32 %v788, %v720
    %v790 = vadd.f32 %v789, %v721
    %v791 = vadd.f32 %v790, %v722
    %v792 = vadd.f32 %v791, %v723
    %v793 = vadd.f32 %v792, %v724
    %v794 = vadd.f32 %v793, %v725
    %v795 = vadd.f32 %v794, %v726
    %v796 = vadd.f32 %v795, %v727
    %v797 = vadd.f32 %v796, %v728
    %v798 = vadd.f32 %v797, %v729
    %v799 = vadd.f32 %v798, %v730
    %v800 = vadd.f32 %v799, %v731
    %v801 = vrot.slane %v800, 4
    %v802 = vadd.f32 %v800, %v801
    %v803 = vrot.slane %v802, 2
    %v804 = vadd.f32 %v802, %v803
    %v805 = vrot.slane %v804, 1
    %v806 = vadd.f32 %v804, %v805
    %vm809 = vcmask 1041409
    %v810 = vsel %vm809, %v806, %v769
    %v812 = vadd.f32 %v732, %v810
    %813 = vst [vmem:[#allocation2] sm:$0x3] %v812
    // Predicated region
    $region26: #{network_forward.1} parent=1 // pred_check
      %p814 = pneg %p22
    $region27: #{network_forward.1} parent=1 // pred_check_branch
      %816 = sbr.rel (%p814) target = $region29
    $region28: #{network_forward.1} parent=1 // pred_region
      %v817 = vld [vmem:[#allocation2] sm:$0x3]
      %v818 = vld [vmem:[%s3] sm:$0xff]
      %v819 = vld [vmem:[%s3 + $0x8] sm:$0xff]
      %v820 = vld [vmem:[%s3 + $0x10] sm:$0xff]
      %v821 = vld [vmem:[%s3 + $0x18] sm:$0xff]
      %v822 = vld [vmem:[%s3 + $0x20] sm:$0xff]
      %v823 = vld [vmem:[%s3 + $0x28] sm:$0xff]
      %v824 = vld [vmem:[%s3 + $0x30] sm:$0xff]
      %v825 = vld [vmem:[%s3 + $0x38] sm:$0xff]
      %v826 = vld [vmem:[%s3 + $0x40] sm:$0xff]
      %v827 = vld [vmem:[%s3 + $0x48] sm:$0xff]
      %v828 = vld [vmem:[%s3 + $0x50] sm:$0xff]
      %v829 = vld [vmem:[%s3 + $0x58] sm:$0xff]
      %v830 = vld [vmem:[%s3 + $0x60] sm:$0xff]
      %v831 = vld [vmem:[%s3 + $0x68] sm:$0xff]
      %v832 = vld [vmem:[%s3 + $0x70] sm:$0xff]
      %v833 = vld [vmem:[%s3 + $0x78] sm:$0xff]
      %v834 = vld [vmem:[%s4] sm:$0x1]
      %v836 = vlaneseq
      %v837 = vshrl.u32 %v836, 7
      %v838 = vsub.s32 0, %v837
      %v839 = vrot.slane %v834, %v838
      %841 = vmatprep.subr.mxu0 0.0
      %842 = vmatpush1.msra.mxu0 %v833
      %843 = vmatprep.subr.mxu0 0.0
      %844 = vmatpush1.msra.mxu0 %v832
      %845 = vmatprep.subr.mxu0 0.0
      %846 = vmatpush1.msra.mxu0 %v831
      %847 = vmatprep.subr.mxu0 0.0
      %848 = vmatpush1.msra.mxu0 %v830
      %849 = vmatprep.subr.mxu0 0.0
      %850 = vmatpush1.msra.mxu0 %v829
      %851 = vmatprep.subr.mxu0 0.0
      %852 = vmatpush1.msra.mxu0 %v828
      %853 = vmatprep.subr.mxu0 0.0
      %854 = vmatpush1.msra.mxu0 %v827
      %855 = vmatprep.subr.mxu0 0.0
      %856 = vmatpush1.msra.mxu0 %v826
      %857 = vmatprep.subr.mxu0 0.0
      %858 = vmatpush1.msra.mxu0 %v825
      %859 = vmatprep.subr.mxu0 0.0
      %860 = vmatpush1.msra.mxu0 %v824
      %861 = vmatprep.subr.mxu0 0.0
      %862 = vmatpush1.msra.mxu0 %v823
      %863 = vmatprep.subr.mxu0 0.0
      %864 = vmatpush1.msra.mxu0 %v822
      %865 = vmatprep.subr.mxu0 0.0
      %866 = vmatpush1.msra.mxu0 %v821
      %867 = vmatprep.subr.mxu0 0.0
      %868 = vmatpush1.msra.mxu0 %v820
      %869 = vmatprep.subr.mxu0 0.0
      %870 = vmatpush1.msra.mxu0 %v819
      %871 = vmatprep.subr.mxu0 0.0
      %872 = vmatpush1.msra.mxu0 %v818
      %873 = vmatprep.subr.mxu0 0.0
      %874 = vmatpush2.msra.mxu0 0.0
      %875 = vmatprep.subr.mxu0 0.0
      %876 = vmatpush2.msra.mxu0 0.0
      %877 = vmatprep.subr.mxu0 0.0
      %878 = vmatpush2.msra.mxu0 0.0
      %879 = vmatprep.subr.mxu0 0.0
      %880 = vmatpush2.msra.mxu0 0.0
      %881 = vmatprep.subr.mxu0 0.0
      %882 = vmatpush2.msra.mxu0 0.0
      %883 = vmatprep.subr.mxu0 0.0
      %884 = vmatpush2.msra.mxu0 0.0
      %885 = vmatprep.subr.mxu0 0.0
      %886 = vmatpush2.msra.mxu0 0.0
      %887 = vmatprep.subr.mxu0 0.0
      %888 = vmatpush2.msra.mxu0 0.0
      %889 = vmatprep.subr.mxu0 0.0
      %890 = vmatpush2.msra.mxu0 0.0
      %891 = vmatprep.subr.mxu0 0.0
      %892 = vmatpush2.msra.mxu0 0.0
      %893 = vmatprep.subr.mxu0 0.0
      %894 = vmatpush2.msra.mxu0 0.0
      %895 = vmatprep.subr.mxu0 0.0
      %896 = vmatpush2.msra.mxu0 0.0
      %897 = vmatprep.subr.mxu0 0.0
      %898 = vmatpush2.msra.mxu0 0.0
      %899 = vmatprep.subr.mxu0 0.0
      %900 = vmatpush2.msra.mxu0 0.0
      %901 = vmatprep.subr.mxu0 0.0
      %902 = vmatpush2.msra.mxu0 0.0
      %903 = vmatprep.subr.mxu0 0.0
      %904 = vmatpush2.msra.mxu0 0.0
      %905 = vmatprep.mubr.f32.mxu0 0.0
      %906 = vmatmul.mubr.f32.gmra.mxu0 %v817
      %v907 = vpop.f32.mrf.mxu0
      %v908 = vadd.f32 %v839, %v907
      %v909 = vpop.f32.mrf.mxu0
      %910 = vdwg.mxu0
      %911 = vst [vmem:[#allocation3] sm:$0x3] %v908
    $region29: #{network_forward.1} parent=1 // pred_fallthru
      _
    // Predicated region
    $region30: #{network_forward.1} parent=1 // pred_check
      _
    $region31: #{network_forward.1} parent=1 // pred_check_branch
      %913 = sbr.rel (0) target = $region33
    $region32: #{network_forward.1} parent=1 // pred_region
      %s915 = ssub.s32 32, 32
      %916 = vsyncadd [#allocation4], %s915
      %s918 = sshll.u32 [#allocation3], 4
      %s919 = int_to_ptr.vmem [resolvable:$true] %s918
      %921 = dma.vmem_to_hbm [thread:$0]  %s919, 32, %s5, [#allocation4]
    $region33: #{network_forward.1} parent=1 // pred_fallthru
      _
    // Predicated region
    $region34: #{network_forward.1} parent=1 // pred_check
      _
    $region35: #{network_forward.1} parent=1 // pred_check_branch
      %923 = sbr.rel (0) target = $region37
    $region36: #{network_forward.1} parent=1 // pred_region
      %924 = dma.done [#allocation4], 32
    $region37: #{network_forward.1} parent=1 // pred_fallthru
      _
    %925 = vsyncpa [#allocation4], 1

</llo_original>
